<compile_context>
chip_gen: v7x
topology: tpu7x:2x2x1
jax: 0.10.0
libtpu: 0.0.40
codegen_flags: <defaults>
</compile_context>

<pallas_src>
import functools

import jax
import jax.numpy as jnp
from jax.experimental import pallas as pl
from jax.experimental.pallas import tpu as pltpu

EPS = 1e-5


def _round_up(a, b):
    return (a + b - 1) // b * b


def _pick_row_tile(n_rows, per_row_bytes, budget_bytes=12 * 1024 * 1024):
    """Largest row tile whose single-buffer footprint stays within budget.

    Multiple of 128 (so the lane-major y block stays layout-legal when there is
    more than one row tile), clamped to [128, 1024]; if the whole batch fits in
    one tile, just use the 8-aligned row count (single tile, no constraint).
    """
    tn = budget_bytes // max(per_row_bytes, 1)
    tn = max(128, min(1024, (tn // 128) * 128))
    full = _round_up(n_rows, 8)
    if full <= tn:
        return int(full)
    return int(tn)


def _pick_feat_tile(fk):
    """Feature tile for the stats kernel: multiple of 128 dividing fk, preferring
    >= 2 tiles (v7x megacore on the 'parallel' axis) and <= 512 lanes per tile."""
    if fk <= 128:
        return fk
    for tf in (512, 384, 256, 128):
        if tf < fk and fk % tf == 0:
            return tf
    return fk


def _stats_kernel(x_ref, y_ref, sum_ref, sumsq_ref, cnt_ref, *, n_rows, needs_mask):
    """Accumulate per-domain Sum(x), Sum(x^2) (MXU) and counts (lane reduce)."""
    r = pl.program_id(1)                               # row-tile index (arbitrary axis)

    @pl.when(r == 0)
    def _():
        sum_ref[...] = jnp.zeros_like(sum_ref)
        sumsq_ref[...] = jnp.zeros_like(sumsq_ref)
        cnt_ref[...] = jnp.zeros_like(cnt_ref)

    x = x_ref[...].astype(jnp.float32)                 # (TN, TF)
    y_row = y_ref[...]                                 # (1, TN) int32, lane-major
    tn = x.shape[0]
    d_pad = sum_ref.shape[0]

    # Lane-dense transposed one-hot: sublane = domain, lane = row.
    dom = jax.lax.broadcasted_iota(jnp.int32, (d_pad, tn), 0)
    onehot_t = (y_row == dom).astype(jnp.float32)      # (D_pad, TN)

    if needs_mask:
        # Ragged row tail: zero out-of-range rows so garbage in the partial
        # block (possibly NaN/Inf) cannot reach the accumulators.
        row_ids = jax.lax.broadcasted_iota(jnp.int32, (tn, 1), 0) + r * tn
        x = jnp.where(row_ids < n_rows, x, 0.0)

    # MXU-native (D_pad, TN) @ (TN, TF) segment sums.
    sum_ref[...] += jnp.dot(onehot_t, x, preferred_element_type=jnp.float32)
    sumsq_ref[...] += jnp.dot(onehot_t, x * x, preferred_element_type=jnp.float32)
    # Counts: cross-lane reduction of the one-hot (no third matmul, no ones_like).
    cnt_ref[...] += jnp.sum(onehot_t, axis=1, keepdims=True)


def _apply_kernel(x_ref, y_ref, scale_ref, shift_ref, out_ref):
    """Single fused apply pass: out = x * scale[y] + shift[y] (lane-dense store)."""
    x = x_ref[...].astype(jnp.float32)                 # (TN, Fk)
    y = y_ref[...]                                     # (TN, 1) int32
    tn = x.shape[0]
    d_pad = scale_ref.shape[0]

    dom = jax.lax.broadcasted_iota(jnp.int32, (tn, d_pad), 1)
    onehot = (y == dom).astype(jnp.float32)            # (TN, D_pad)
    row_scale = jnp.dot(onehot, scale_ref[...], preferred_element_type=jnp.float32)
    row_shift = jnp.dot(onehot, shift_ref[...], preferred_element_type=jnp.float32)

    # Out-of-range / padded labels gather scale=shift=0 -> output 0 (matches ref).
    out_ref[...] = (x * row_scale + row_shift).astype(out_ref.dtype)


def ds_batch_norm(x, y, gamma, beta, *, row_tile=None):
    """x: (N, F) f32/bf16, y: (N,) int, gamma/beta: (D, F) -> (N, F) in x.dtype."""
    N, F = x.shape
    D = gamma.shape[0]
    D_pad = _round_up(D, 8)

    # Keep x un-padded and un-cast whenever the feature dim is lane-aligned.
    if F % 128 == 0:
        Fk = F
        xk = x
    else:
        Fk = _round_up(F, 128)
        xk = jnp.pad(x, ((0, 0), (0, Fk - F)))

    x_item = jnp.dtype(xk.dtype).itemsize
    if row_tile is None:
        TN = _pick_row_tile(N, Fk * 2 * x_item)        # x tile + out tile per buffer
    else:
        TN = int(row_tile)
    assert TN % 8 == 0
    nt = pl.cdiv(N, TN)
    assert nt == 1 or TN % 128 == 0                    # keeps the (1, TN) y block legal
    needs_mask = (N % TN) != 0

    TF = _pick_feat_tile(Fk)
    nf = Fk // TF

    # y padded (cheap: N int32s) to the tiled row count with -1 -> contributes 0.
    Ny = nt * TN
    yk = jnp.pad(y.astype(jnp.int32), (0, Ny - N), constant_values=-1)
    y_row = yk.reshape(1, Ny)                          # lane-major, for the stats kernel
    y_col = yk.reshape(Ny, 1)                          # per-row column, for the apply kernel

    # Within v7x's 64 MiB physical VMEM; explicitly above v5e's 16 MiB scoped default.
    vmem_limit = 48 * 1024 * 1024

    # ---- Phase 1: global per-domain statistics (accumulated over row tiles) ----
    stat_shape = jax.ShapeDtypeStruct((D_pad, Fk), jnp.float32)
    cnt_shape = jax.ShapeDtypeStruct((D_pad, nf * 128), jnp.float32)
    sums, sumsqs, cnts = pl.pallas_call(
        functools.partial(_stats_kernel, n_rows=N, needs_mask=needs_mask),
        out_shape=(stat_shape, stat_shape, cnt_shape),
        grid_spec=pltpu.PrefetchScalarGridSpec(
            num_scalar_prefetch=0,
            grid=(nf, nt),
            in_specs=[
                pl.BlockSpec((TN, TF), lambda f, r: (r, f)),
                pl.BlockSpec((1, TN), lambda f, r: (0, r)),
            ],
            out_specs=(
                pl.BlockSpec((D_pad, TF), lambda f, r: (0, f)),
                pl.BlockSpec((D_pad, TF), lambda f, r: (0, f)),
                pl.BlockSpec((D_pad, 128), lambda f, r: (0, f)),
            ),
        ),
        compiler_params=pltpu.CompilerParams(
            dimension_semantics=("parallel", "arbitrary"),
            vmem_limit_bytes=vmem_limit),
    )(xk, y_row)
    counts = cnts[:, :1]                               # (D_pad, 1); all lanes identical

    # ---- Tiny JAX glue: per-domain scale/shift tables (hoisted out of phase 2) ----
    gk = jnp.pad(gamma.astype(jnp.float32), ((0, D_pad - D), (0, Fk - F)))
    bk = jnp.pad(beta.astype(jnp.float32), ((0, D_pad - D), (0, Fk - F)))
    safe = jnp.maximum(counts, 1.0)
    mean = sums / safe
    var = jnp.maximum(sumsqs / safe - mean * mean, 0.0)           # biased variance
    scale_bn = gk * jax.lax.rsqrt(var + EPS)
    shift_bn = bk - mean * scale_bn
    use_bn = counts > 1.5                              # count > 1  -> batch norm
    scale_tbl = jnp.where(use_bn, scale_bn, 1.0)       # count == 1 -> passthrough x
    shift_tbl = jnp.where(use_bn, shift_bn, 0.0)
    in_range = (jnp.arange(D_pad) < D)[:, None]        # domains >= D -> output 0
    scale_tbl = jnp.where(in_range, scale_tbl, 0.0)
    shift_tbl = jnp.where(in_range, shift_tbl, 0.0)

    # ---- Phase 2: fused gather + affine apply over row tiles ----
    out = pl.pallas_call(
        _apply_kernel,
        out_shape=jax.ShapeDtypeStruct((N, Fk), x.dtype),
        grid_spec=pltpu.PrefetchScalarGridSpec(
            num_scalar_prefetch=0,
            grid=(nt,),
            in_specs=[
                pl.BlockSpec((TN, Fk), lambda r: (r, 0)),
                pl.BlockSpec((TN, 1), lambda r: (r, 0)),
                pl.BlockSpec((D_pad, Fk), lambda r: (0, 0)),
                pl.BlockSpec((D_pad, Fk), lambda r: (0, 0)),
            ],
            out_specs=pl.BlockSpec((TN, Fk), lambda r: (r, 0)),
        ),
        compiler_params=pltpu.CompilerParams(
            dimension_semantics=("parallel",),         # row tiles shard across v7x cores
            vmem_limit_bytes=vmem_limit),
    )(xk, y_col, scale_tbl, shift_tbl)

    return out if Fk == F else out[:, :F]


def ds_batch_norm_ref(x, y, gamma, beta):
    """Pure-JAX reference mirroring the PyTorch forward."""
    N, F = x.shape
    D = gamma.shape[0]
    out = jnp.zeros((N, F), jnp.float32)
    for d in range(D):
        mask = (y == d).astype(jnp.float32)[:, None]
        count = jnp.sum(mask)
        safe = jnp.maximum(count, 1.0)
        mean = jnp.sum(x * mask, axis=0, keepdims=True) / safe
        var = jnp.sum(((x - mean) * mask) ** 2, axis=0, keepdims=True) / safe
        normed = gamma[d][None, :] * (x - mean) / jnp.sqrt(var + EPS) + beta[d][None, :]
        res = jnp.where(count > 1.5, normed, x)
        out = out + jnp.where(mask > 0, res, 0.0)
    return out


if __name__ == "__main__":
    # Case 1: module-scale example (batch=8, num_features=32, n_domains=3).
    key = jax.random.PRNGKey(0)
    N, F, D = 8, 32, 3
    kx, kg, kb = jax.random.split(key, 3)
    x = jax.random.normal(kx, (N, F), dtype=jnp.float32)
    # domain 0 -> 4 rows, domain 1 -> 3 rows, domain 2 -> 1 row (passthrough branch)
    y = jnp.array([0, 0, 0, 1, 1, 2, 0, 1], dtype=jnp.int32)
    gamma = 1.0 + 0.1 * jax.random.normal(kg, (D, F), dtype=jnp.float32)
    beta = 0.1 * jax.random.normal(kb, (D, F), dtype=jnp.float32)
    out = jax.block_until_ready(ds_batch_norm(x, y, gamma, beta))
    ref = ds_batch_norm_ref(x, y, gamma, beta)
    assert out.shape == (N, F)
    assert jnp.allclose(out, ref, atol=1e-4, rtol=1e-4)

    # Case 2: lane-aligned features (no x padding), ragged rows, multiple row tiles
    # and >=2 feature tiles in the stats phase (exercises the new fast path).
    N2, F2, D2 = 200, 256, 4
    k1, k2, k3, k4 = jax.random.split(jax.random.PRNGKey(1), 4)
    x2 = jax.random.normal(k1, (N2, F2), dtype=jnp.float32)
    y2 = jax.random.randint(k2, (N2,), 0, D2, dtype=jnp.int32)
    gamma2 = 1.0 + 0.1 * jax.random.normal(k3, (D2, F2), dtype=jnp.float32)
    beta2 = 0.1 * jax.random.normal(k4, (D2, F2), dtype=jnp.float32)
    out2 = jax.block_until_ready(ds_batch_norm(x2, y2, gamma2, beta2, row_tile=128))
    ref2 = ds_batch_norm_ref(x2, y2, gamma2, beta2)
    assert jnp.allclose(out2, ref2, atol=1e-3, rtol=1e-3)

    print("KERNEL_OK")
</pallas_src>

<mosaic_0001>
module attributes {stable_mosaic.version = 11 : i64} {
  func.func @_stats_kernel(%arg0: i32, %arg1: i32, %arg2: memref<8x128xf32, #tpu.memory_space<vmem>>, %arg3: memref<1x8xi32, #tpu.memory_space<vmem>>, %arg4: memref<8x128xf32, #tpu.memory_space<vmem>>, %arg5: memref<8x128xf32, #tpu.memory_space<vmem>>, %arg6: memref<8x128xf32, #tpu.memory_space<vmem>>) attributes {dimension_semantics = [#tpu.dimension_semantics<parallel>, #tpu.dimension_semantics<arbitrary>], iteration_bounds = array<i64: 1, 1>, scalar_prefetch = 0 : i64, scratch_operands = 0 : i64, tpu.core_type = #tpu.core_type<tc>, window_params = [{transform_indices = @transform_0, window_bounds = array<i64: 8, 128>}, {transform_indices = @transform_1, window_bounds = array<i64: 1, 8>}, {transform_indices = @transform_2, window_bounds = array<i64: 8, 128>}, {transform_indices = @transform_3, window_bounds = array<i64: 8, 128>}, {transform_indices = @transform_4, window_bounds = array<i64: 8, 128>}]} {
    %c0_i32 = arith.constant 0 : i32
    %0 = arith.cmpi eq, %arg1, %c0_i32 : i32
    %1 = arith.extui %0 : i1 to i32
    %c0_i32_0 = arith.constant 0 : i32
    %2 = arith.cmpi ne, %1, %c0_i32_0 : i32
    scf.if %2 {
      %cst_18 = arith.constant 0.000000e+00 : f32
      %25 = vector.broadcast %cst_18 : f32 to vector<8x128xf32>
      %c0_19 = arith.constant 0 : index
      %c0_20 = arith.constant 0 : index
      %26 = vector.load %arg4[%c0_19, %c0_20] : memref<8x128xf32, #tpu.memory_space<vmem>>, vector<8x128xf32>
      tpu.vector_store %arg4[%c0_19, %c0_20], %25 {strides = array<i32>} : memref<8x128xf32, #tpu.memory_space<vmem>>, vector<8x128xf32>,
      %cst_21 = arith.constant 0.000000e+00 : f32
      %27 = vector.broadcast %cst_21 : f32 to vector<8x128xf32>
      %c0_22 = arith.constant 0 : index
      %c0_23 = arith.constant 0 : index
      %28 = vector.load %arg5[%c0_22, %c0_23] : memref<8x128xf32, #tpu.memory_space<vmem>>, vector<8x128xf32>
      tpu.vector_store %arg5[%c0_22, %c0_23], %27 {strides = array<i32>} : memref<8x128xf32, #tpu.memory_space<vmem>>, vector<8x128xf32>,
      %cst_24 = arith.constant 0.000000e+00 : f32
      %29 = vector.broadcast %cst_24 : f32 to vector<8x128xf32>
      %c0_25 = arith.constant 0 : index
      %c0_26 = arith.constant 0 : index
      %30 = vector.load %arg6[%c0_25, %c0_26] : memref<8x128xf32, #tpu.memory_space<vmem>>, vector<8x128xf32>
      tpu.vector_store %arg6[%c0_25, %c0_26], %29 {strides = array<i32>} : memref<8x128xf32, #tpu.memory_space<vmem>>, vector<8x128xf32>,
    } else {
    }
    %c0 = arith.constant 0 : index
    %c0_1 = arith.constant 0 : index
    %3 = vector.load %arg2[%c0, %c0_1] : memref<8x128xf32, #tpu.memory_space<vmem>>, vector<8x128xf32>
    %c0_2 = arith.constant 0 : index
    %c0_3 = arith.constant 0 : index
    %4 = vector.load %arg3[%c0_2, %c0_3] : memref<1x8xi32, #tpu.memory_space<vmem>>, vector<1x8xi32>
    %5 = tpu.iota {dimensions = array<i32: 0>} : vector<8x8xi32>
    %6 = vector.broadcast %4 : vector<1x8xi32> to vector<8x8xi32>
    %7 = arith.cmpi eq, %6, %5 : vector<8x8xi32>
    %8 = arith.extui %7 : vector<8x8xi1> to vector<8x8xi32>
    %9 = arith.sitofp %8 : vector<8x8xi32> to vector<8x8xf32>
    %c0_4 = arith.constant 0 : index
    %c0_5 = arith.constant 0 : index
    %10 = vector.load %arg4[%c0_4, %c0_5] : memref<8x128xf32, #tpu.memory_space<vmem>>, vector<8x128xf32>
    %cst = arith.constant dense<0.000000e+00> : vector<8x128xf32>
    %11 = tpu.matmul %9, %3, %cst {dimension_numbers = #tpu.dot_dimension_numbers<[1], [0], [0], [1], [0, 0, 1, 1], [], []>} : vector<8x8xf32>, vector<8x128xf32>, vector<8x128xf32> -> vector<8x128xf32>
    %12 = arith.addf %10, %11 : vector<8x128xf32>
    %c0_6 = arith.constant 0 : index
    %c0_7 = arith.constant 0 : index
    %13 = vector.load %arg4[%c0_6, %c0_7] : memref<8x128xf32, #tpu.memory_space<vmem>>, vector<8x128xf32>
    tpu.vector_store %arg4[%c0_6, %c0_7], %12 {strides = array<i32>} : memref<8x128xf32, #tpu.memory_space<vmem>>, vector<8x128xf32>,
    %c0_8 = arith.constant 0 : index
    %c0_9 = arith.constant 0 : index
    %14 = vector.load %arg5[%c0_8, %c0_9] : memref<8x128xf32, #tpu.memory_space<vmem>>, vector<8x128xf32>
    %15 = arith.mulf %3, %3 : vector<8x128xf32>
    %cst_10 = arith.constant dense<0.000000e+00> : vector<8x128xf32>
    %16 = tpu.matmul %9, %15, %cst_10 {dimension_numbers = #tpu.dot_dimension_numbers<[1], [0], [0], [1], [0, 0, 1, 1], [], []>} : vector<8x8xf32>, vector<8x128xf32>, vector<8x128xf32> -> vector<8x128xf32>
    %17 = arith.addf %14, %16 : vector<8x128xf32>
    %c0_11 = arith.constant 0 : index
    %c0_12 = arith.constant 0 : index
    %18 = vector.load %arg5[%c0_11, %c0_12] : memref<8x128xf32, #tpu.memory_space<vmem>>, vector<8x128xf32>
    tpu.vector_store %arg5[%c0_11, %c0_12], %17 {strides = array<i32>} : memref<8x128xf32, #tpu.memory_space<vmem>>, vector<8x128xf32>,
    %c0_13 = arith.constant 0 : index
    %c0_14 = arith.constant 0 : index
    %19 = vector.load %arg6[%c0_13, %c0_14] : memref<8x128xf32, #tpu.memory_space<vmem>>, vector<8x128xf32>
    %cst_15 = arith.constant dense<0.000000e+00> : vector<8xf32>
    %20 = vector.multi_reduction <add>, %9, %cst_15 [1] : vector<8x8xf32> to vector<8xf32>
    %21 = vector.shape_cast %20 : vector<8xf32> to vector<8x1xf32>
    %22 = vector.broadcast %21 : vector<8x1xf32> to vector<8x128xf32>
    %23 = arith.addf %19, %22 : vector<8x128xf32>
    %c0_16 = arith.constant 0 : index
    %c0_17 = arith.constant 0 : index
    %24 = vector.load %arg6[%c0_16, %c0_17] : memref<8x128xf32, #tpu.memory_space<vmem>>, vector<8x128xf32>
    tpu.vector_store %arg6[%c0_16, %c0_17], %23 {strides = array<i32>} : memref<8x128xf32, #tpu.memory_space<vmem>>, vector<8x128xf32>,
    return
  }
  func.func @transform_0(%arg0: i32, %arg1: i32) -> (i32, i32) {
    %c0_i32 = arith.constant 0 : i32
    return %arg1, %arg0 : i32, i32
  }
  func.func @transform_1(%arg0: i32, %arg1: i32) -> (i32, i32) {
    %c0_i32 = arith.constant 0 : i32
    %c0_i32_0 = arith.constant 0 : i32
    return %c0_i32, %arg1 : i32, i32
  }
  func.func @transform_2(%arg0: i32, %arg1: i32) -> (i32, i32) {
    %c0_i32 = arith.constant 0 : i32
    %c0_i32_0 = arith.constant 0 : i32
    return %c0_i32, %arg0 : i32, i32
  }
  func.func @transform_3(%arg0: i32, %arg1: i32) -> (i32, i32) {
    %c0_i32 = arith.constant 0 : i32
    %c0_i32_0 = arith.constant 0 : i32
    return %c0_i32, %arg0 : i32, i32
  }
  func.func @transform_4(%arg0: i32, %arg1: i32) -> (i32, i32) {
    %c0_i32 = arith.constant 0 : i32
    %c0_i32_0 = arith.constant 0 : i32
    return %c0_i32, %arg0 : i32, i32
  }
}

</mosaic_0001>

<llo_original>
// kernel: tpu_custom_call.1
$region0: #{tpu_custom_call.1}
  #allocation0 [shape = 'u32[]', space=smem, size = 0x4, offset = 0x4, fixed_abs, tag = 'smem constant byte address 0x4 - core index']
  #allocation1 [shape = 'u32[144,128]{1,0:T(1,128)}', space=vmem, size = 0x12000, scoped, tag = 'internal scratch']
  %s0 = inlined_call_operand.hbm [shape: f32[8,128], index: 0, kind: input, shape index: {}]
  %s1 = inlined_call_operand.vmem [shape: s32[1,8], index: 1, kind: input, shape index: {}]
  %s2 = inlined_call_operand.hbm [shape: f32[8,128], index: 2, kind: output, shape index: {0}]
  %s3 = inlined_call_operand.hbm [shape: f32[8,128], index: 3, kind: output, shape index: {1}]
  %s4 = inlined_call_operand.hbm [shape: f32[8,128], index: 4, kind: output, shape index: {2}]
  %5 = xla_tuple %s2, %s3, %s4
  %s6 = sld [smem:[#allocation0]]
  $region42: #{tpu_custom_call.1} parent=0
    _
  %s8 = ssub.s32 1, %s6
  %s9 = scalar_select 0, %s8, %s6
  $region1: #{tpu_custom_call.1} parent=0
    #allocation2 [shape = 'u8[4096]{0}', space=vmem, size = 0x1000, scoped, tag = 'input window, operand 0, single buffered']
    #allocation3 [shape = 's32[1]{0}', space=sflag, size = 0x4, scoped, tag = 'scoped memory for tpu_custom_call.1']
    #allocation4 [shape = 's32[1]{0}', space=sflag, size = 0x4, scoped, tag = 'scoped memory for tpu_custom_call.1']
    #allocation5 [shape = 'u8[4096]{0}', space=vmem, size = 0x1000, scoped, tag = 'output window, operand 0, single buffered']
    #allocation6 [shape = 'u8[4096]{0}', space=vmem, size = 0x1000, scoped, tag = 'output window, operand 1, single buffered']
    #allocation7 [shape = 's32[1]{0}', space=sflag, size = 0x4, scoped, tag = 'scoped memory for tpu_custom_call.1']
    #allocation8 [shape = 'u8[4096]{0}', space=vmem, size = 0x1000, scoped, tag = 'output window, operand 2, single buffered']
    %10 = vsyncpa [#allocation3], 0
    %11 = vsyncpa [#allocation4], 0
    %12 = vsyncpa [#allocation7], 0
    // Predicated region
    $region2: #{tpu_custom_call.1} parent=1 // pred_check
      _
    $region3: #{tpu_custom_call.1} parent=1 // pred_check_branch
      %14 = sbr.rel (0) target = $region5
    $region4: #{tpu_custom_call.1} parent=1 // pred_region
      %s16 = ssub.s32 128, 128
      %17 = vsyncadd [#allocation3], %s16
      %s19 = sshll.u32 [#allocation2], 4
      %s20 = int_to_ptr.vmem [resolvable:$true] %s19
      %22 = dma.hbm_to_vmem [thread:$0]  %s0, 128, %s20, [#allocation3]
    $region5: #{tpu_custom_call.1} parent=1 // pred_fallthru
      _
    // Predicated region
    $region6: #{tpu_custom_call.1} parent=1 // pred_check
      _
    $region7: #{tpu_custom_call.1} parent=1 // pred_check_branch
      %24 = sbr.rel (0) target = $region9
    $region8: #{tpu_custom_call.1} parent=1 // pred_region
      _
    $region9: #{tpu_custom_call.1} parent=1 // pred_fallthru
      _
    // Predicated region
    $region10: #{tpu_custom_call.1} parent=1 // pred_check
      _
    $region11: #{tpu_custom_call.1} parent=1 // pred_check_branch
      %26 = sbr.rel (0) target = $region13
    $region12: #{tpu_custom_call.1} parent=1 // pred_region
      %27 = dma.done [#allocation3], 128
    $region13: #{tpu_custom_call.1} parent=1 // pred_fallthru
      _
    %p28 = scmp.eq.s32.totalorder 0, 0
    // Predicated region
    $region14: #{tpu_custom_call.1} parent=1 // pred_check
      %p29 = pneg %p28
    $region15: #{tpu_custom_call.1} parent=1 // pred_check_branch
      %31 = sbr.rel (%p29) target = $region17
    $region16: #{tpu_custom_call.1} parent=1 // pred_region
      %32 = vst [vmem:[#allocation5] sm:$0xff] 0.0
      %33 = vst [vmem:[#allocation6] sm:$0xff] 0.0
      %34 = vst [vmem:[#allocation8] sm:$0xff] 0.0
    $region17: #{tpu_custom_call.1} parent=1 // pred_fallthru
      _
    %v35 = vld [vmem:[#allocation2] sm:$0xff]
    %v36 = vld [vmem:[%s1] sm:$0x1]
    %v37 = vlaneseq
    %v38 = vshrl.u32 %v37, 7
    %v39 = vlaneseq
    %v40 = vshrl.u32 %v39, 7
    %v41 = vsub.s32 0, %v40
    %v42 = vrot.slane %v36, %v41
    %vm43 = vcmp.eq.s32.totalorder %v42, %v38
    %v44 = vsel %vm43, 1, 0
    %v45 = vcvt.s32.f32 %v44
    %v46 = vld [vmem:[#allocation5] sm:$0xff]
    %vm47 = vcmask 64512
    %v49 = vsel %vm47, %v45, 0
    %51 = vmatprep.subr.mxu0 0.0
    %52 = vmatpush1.msra.mxu0 %v35
    %53 = vmatprep.subr.mxu0 0.0
    %54 = vmatpush1.msra.mxu0 0.0
    %55 = vmatprep.subr.mxu0 0.0
    %56 = vmatpush1.msra.mxu0 0.0
    %57 = vmatprep.subr.mxu0 0.0
    %58 = vmatpush1.msra.mxu0 0.0
    %59 = vmatprep.subr.mxu0 0.0
    %60 = vmatpush1.msra.mxu0 0.0
    %61 = vmatprep.subr.mxu0 0.0
    %62 = vmatpush1.msra.mxu0 0.0
    %63 = vmatprep.subr.mxu0 0.0
    %64 = vmatpush1.msra.mxu0 0.0
    %65 = vmatprep.subr.mxu0 0.0
    %66 = vmatpush1.msra.mxu0 0.0
    %67 = vmatprep.subr.mxu0 0.0
    %68 = vmatpush1.msra.mxu0 0.0
    %69 = vmatprep.subr.mxu0 0.0
    %70 = vmatpush1.msra.mxu0 0.0
    %71 = vmatprep.subr.mxu0 0.0
    %72 = vmatpush1.msra.mxu0 0.0
    %73 = vmatprep.subr.mxu0 0.0
    %74 = vmatpush1.msra.mxu0 0.0
    %75 = vmatprep.subr.mxu0 0.0
    %76 = vmatpush1.msra.mxu0 0.0
    %77 = vmatprep.subr.mxu0 0.0
    %78 = vmatpush1.msra.mxu0 0.0
    %79 = vmatprep.subr.mxu0 0.0
    %80 = vmatpush1.msra.mxu0 0.0
    %81 = vmatprep.subr.mxu0 0.0
    %82 = vmatpush1.msra.mxu0 0.0
    %83 = vmatprep.subr.mxu0 0.0
    %84 = vmatpush1.msra.mxu0 0.0
    %85 = vmatprep.subr.mxu0 0.0
    %86 = vmatpush1.msra.mxu0 0.0
    %87 = vmatprep.subr.mxu0 0.0
    %88 = vmatpush1.msra.mxu0 0.0
    %89 = vmatprep.subr.mxu0 0.0
    %90 = vmatpush1.msra.mxu0 0.0
    %91 = vmatprep.subr.mxu0 0.0
    %92 = vmatpush1.msra.mxu0 0.0
    %93 = vmatprep.subr.mxu0 0.0
    %94 = vmatpush1.msra.mxu0 0.0
    %95 = vmatprep.subr.mxu0 0.0
    %96 = vmatpush1.msra.mxu0 0.0
    %97 = vmatprep.subr.mxu0 0.0
    %98 = vmatpush1.msra.mxu0 0.0
    %99 = vmatprep.subr.mxu0 0.0
    %100 = vmatpush1.msra.mxu0 0.0
    %101 = vmatprep.subr.mxu0 0.0
    %102 = vmatpush1.msra.mxu0 0.0
    %103 = vmatprep.subr.mxu0 0.0
    %104 = vmatpush1.msra.mxu0 0.0
    %105 = vmatprep.subr.mxu0 0.0
    %106 = vmatpush1.msra.mxu0 0.0
    %107 = vmatprep.subr.mxu0 0.0
    %108 = vmatpush1.msra.mxu0 0.0
    %109 = vmatprep.subr.mxu0 0.0
    %110 = vmatpush1.msra.mxu0 0.0
    %111 = vmatprep.subr.mxu0 0.0
    %112 = vmatpush1.msra.mxu0 0.0
    %113 = vmatprep.subr.mxu0 0.0
    %114 = vmatpush1.msra.mxu0 0.0
    %115 = vmatprep.mubr.f32.mxu0 0.0
    %116 = vmatmul.mubr.f32.gmra.mrb[0].mxu0 %v49
    %v117 = vpop.f32.mrb[0].mxu0
    %v118 = vadd.f32 0.0, %v117
    %v119 = vpop.f32.mrb[0].mxu0
    %120 = vdwg.mxu0
    %v121 = vadd.f32 %v46, %v118
    %122 = vst [vmem:[#allocation5] sm:$0xff] %v121
    %v123 = vld [vmem:[#allocation6] sm:$0xff]
    %v124 = vmul.f32 %v35, %v35
    %125 = vmatprep.subr.mxu0 0.0
    %126 = vmatpush1.msra.mxu0 %v124
    %127 = vmatprep.subr.mxu0 0.0
    %128 = vmatpush1.msra.mxu0 0.0
    %129 = vmatprep.subr.mxu0 0.0
    %130 = vmatpush1.msra.mxu0 0.0
    %131 = vmatprep.subr.mxu0 0.0
    %132 = vmatpush1.msra.mxu0 0.0
    %133 = vmatprep.subr.mxu0 0.0
    %134 = vmatpush1.msra.mxu0 0.0
    %135 = vmatprep.subr.mxu0 0.0
    %136 = vmatpush1.msra.mxu0 0.0
    %137 = vmatprep.subr.mxu0 0.0
    %138 = vmatpush1.msra.mxu0 0.0
    %139 = vmatprep.subr.mxu0 0.0
    %140 = vmatpush1.msra.mxu0 0.0
    %141 = vmatprep.subr.mxu0 0.0
    %142 = vmatpush1.msra.mxu0 0.0
    %143 = vmatprep.subr.mxu0 0.0
    %144 = vmatpush1.msra.mxu0 0.0
    %145 = vmatprep.subr.mxu0 0.0
    %146 = vmatpush1.msra.mxu0 0.0
    %147 = vmatprep.subr.mxu0 0.0
    %148 = vmatpush1.msra.mxu0 0.0
    %149 = vmatprep.subr.mxu0 0.0
    %150 = vmatpush1.msra.mxu0 0.0
    %151 = vmatprep.subr.mxu0 0.0
    %152 = vmatpush1.msra.mxu0 0.0
    %153 = vmatprep.subr.mxu0 0.0
    %154 = vmatpush1.msra.mxu0 0.0
    %155 = vmatprep.subr.mxu0 0.0
    %156 = vmatpush1.msra.mxu0 0.0
    %157 = vmatprep.subr.mxu0 0.0
    %158 = vmatpush1.msra.mxu0 0.0
    %159 = vmatprep.subr.mxu0 0.0
    %160 = vmatpush1.msra.mxu0 0.0
    %161 = vmatprep.subr.mxu0 0.0
    %162 = vmatpush1.msra.mxu0 0.0
    %163 = vmatprep.subr.mxu0 0.0
    %164 = vmatpush1.msra.mxu0 0.0
    %165 = vmatprep.subr.mxu0 0.0
    %166 = vmatpush1.msra.mxu0 0.0
    %167 = vmatprep.subr.mxu0 0.0
    %168 = vmatpush1.msra.mxu0 0.0
    %169 = vmatprep.subr.mxu0 0.0
    %170 = vmatpush1.msra.mxu0 0.0
    %171 = vmatprep.subr.mxu0 0.0
    %172 = vmatpush1.msra.mxu0 0.0
    %173 = vmatprep.subr.mxu0 0.0
    %174 = vmatpush1.msra.mxu0 0.0
    %175 = vmatprep.subr.mxu0 0.0
    %176 = vmatpush1.msra.mxu0 0.0
    %177 = vmatprep.subr.mxu0 0.0
    %178 = vmatpush1.msra.mxu0 0.0
    %179 = vmatprep.subr.mxu0 0.0
    %180 = vmatpush1.msra.mxu0 0.0
    %181 = vmatprep.subr.mxu0 0.0
    %182 = vmatpush1.msra.mxu0 0.0
    %183 = vmatprep.subr.mxu0 0.0
    %184 = vmatpush1.msra.mxu0 0.0
    %185 = vmatprep.subr.mxu0 0.0
    %186 = vmatpush1.msra.mxu0 0.0
    %187 = vmatprep.subr.mxu0 0.0
    %188 = vmatpush1.msra.mxu0 0.0
    %189 = vmatprep.mubr.f32.mxu0 0.0
    %190 = vmatmul.mubr.f32.gmra.mrb[0].mxu0 %v49
    %v191 = vpop.f32.mrb[0].mxu0
    %v192 = vadd.f32 0.0, %v191
    %v193 = vpop.f32.mrb[0].mxu0
    %194 = vdwg.mxu0
    %v195 = vadd.f32 %v123, %v192
    %196 = vst [vmem:[#allocation6] sm:$0xff] %v195
    %v197 = vld [vmem:[#allocation8] sm:$0xff]
    %v198 = vsel %vm47, %v45, 0.0
    %199 = vadd.xlane.f32.xlu0 %v198
    %v200 = vpop.xlane.xlu0 %199
    %v201 = vadd.f32 %v197, %v200
    %202 = vst [vmem:[#allocation8] sm:$0xff] %v201
    // Predicated region
    $region18: #{tpu_custom_call.1} parent=1 // pred_check
      _
    $region19: #{tpu_custom_call.1} parent=1 // pred_check_branch
      %204 = sbr.rel (0) target = $region21
    $region20: #{tpu_custom_call.1} parent=1 // pred_region
      %s206 = ssub.s32 128, 128
      %207 = vsyncadd [#allocation4], %s206
      %s209 = sshll.u32 [#allocation5], 4
      %s210 = int_to_ptr.vmem [resolvable:$true] %s209
      %212 = dma.vmem_to_hbm [thread:$0]  %s210, 128, %s2, [#allocation4]
    $region21: #{tpu_custom_call.1} parent=1 // pred_fallthru
      _
    // Predicated region
    $region22: #{tpu_custom_call.1} parent=1 // pred_check
      _
    $region23: #{tpu_custom_call.1} parent=1 // pred_check_branch
      %214 = sbr.rel (0) target = $region25
    $region24: #{tpu_custom_call.1} parent=1 // pred_region
      %s216 = ssub.s32 128, 128
      %217 = vsyncadd [#allocation7], %s216
      %s219 = sshll.u32 [#allocation6], 4
      %s220 = int_to_ptr.vmem [resolvable:$true] %s219
      %222 = dma.vmem_to_hbm [thread:$0]  %s220, 128, %s3, [#allocation7]
    $region25: #{tpu_custom_call.1} parent=1 // pred_fallthru
      _
    // Predicated region
    $region26: #{tpu_custom_call.1} parent=1 // pred_check
      _
    $region27: #{tpu_custom_call.1} parent=1 // pred_check_branch
      %224 = sbr.rel (0) target = $region29
    $region28: #{tpu_custom_call.1} parent=1 // pred_region
      %s226 = ssub.s32 128, 128
      %227 = vsyncadd [#allocation7], %s226
      %s229 = sshll.u32 [#allocation8], 4
      %s230 = int_to_ptr.vmem [resolvable:$true] %s229
      %232 = dma.vmem_to_hbm [thread:$0]  %s230, 128, %s4, [#allocation7]
    $region29: #{tpu_custom_call.1} parent=1 // pred_fallthru
      _
    // Predicated region
    $region30: #{tpu_custom_call.1} parent=1 // pred_check
      _
    $region31: #{tpu_custom_call.1} parent=1 // pred_check_branch
      %234 = sbr.rel (0) target = $region33
    $region32: #{tpu_custom_call.1} parent=1 // pred_region
      %235 = dma.done [#allocation4], 128
    $region33: #{tpu_custom_call.1} parent=1 // pred_fallthru
      _
    // Predicated region
    $region34: #{tpu_custom_call.1} parent=1 // pred_check
      _
    $region35: #{tpu_custom_call.1} parent=1 // pred_check_branch
      %237 = sbr.rel (0) target = $region37
    $region36: #{tpu_custom_call.1} parent=1 // pred_region
      %238 = dma.done [#allocation7], 128
    $region37: #{tpu_custom_call.1} parent=1 // pred_fallthru
      _
    // Predicated region
    $region38: #{tpu_custom_call.1} parent=1 // pred_check
      _
    $region39: #{tpu_custom_call.1} parent=1 // pred_check_branch
      %240 = sbr.rel (0) target = $region41
    $region40: #{tpu_custom_call.1} parent=1 // pred_region
      %241 = dma.done [#allocation7], 128
    $region41: #{tpu_custom_call.1} parent=1 // pred_fallthru
      _
    %242 = vsyncpa [#allocation3], 1
    %243 = vsyncpa [#allocation4], 1
    %244 = vsyncpa [#allocation7], 1

</llo_original>
